<compile_context>
chip_gen: v7x
topology: tpu7x:2x2x1
jax: 0.10.0
libtpu: 0.0.40
codegen_flags: <defaults>
</compile_context>

<pallas_src>
import jax
import jax.numpy as jnp
from jax.experimental import pallas as pl
from jax.experimental.pallas import tpu as pltpu

_LANE = 128
_ROW_ALIGN = 32                 # sublane packing: 8 (f32) / 16 (bf16) / 32 (int8, fp8)
_TARGET_TILE_BYTES = 8 << 20    # ~8 MiB per tile
_VMEM_HEADROOM = 4 << 20        # compiler scratch headroom on top of 4 live buffers
_VMEM_FLOOR = 32 << 20
_VMEM_CAP = 48 << 20            # stay well inside v7x's 64 MiB physical VMEM


def _copy_kernel(x_ref, o_ref):
    # Identity copy of the current (tile_rows, tile_cols) tile.
    o_ref[...] = x_ref[...]


def _lane_dense_layout(total, pixels):
    """Pick a lane-dense (rows, cols, pad_cols) copy slab for `total` elems."""
    if pixels % _LANE == 0:
        return total // pixels, pixels, 0
    # Repack (pure metadata reshape) into a lane-dense width dividing `total`.
    for cols in (4096, 2048, 1024, 512, 256, _LANE):
        if total % cols == 0:
            return total // cols, cols, 0
    # No lane-dense factorization exists: pad the row width up to the next
    # multiple of 128 (sliced back after the kernel) rather than copying a
    # non-lane-aligned block through masked vst.msk partial stores.
    rows = total // pixels
    padded_cols = ((pixels + _LANE - 1) // _LANE) * _LANE
    return rows, padded_cols, padded_cols - pixels


def _choose_tiles(rows, cols, itemsize):
    """Pick (tile_rows, tile_cols) with each tile <= ~8 MiB, lane/sublane aligned."""
    # Columns: keep full width if an 8-row strip fits the budget; otherwise
    # tile columns in multiples of 128 (fixes the old wide-row fallback that
    # put the entire array in one block and could OOM VMEM for big `pixels`).
    if cols <= _LANE or cols * itemsize * 8 <= _TARGET_TILE_BYTES:
        tile_cols = cols
    else:
        tile_cols = max(_LANE, (_TARGET_TILE_BYTES // (8 * itemsize)) // _LANE * _LANE)
        tile_cols = min(tile_cols, cols)

    # Rows: largest tile within budget, multiple of 32 (or the full extent).
    tile_rows = max(1, _TARGET_TILE_BYTES // (tile_cols * itemsize))
    if tile_rows >= rows:
        tile_rows = rows
    elif tile_rows >= _ROW_ALIGN:
        tile_rows = (tile_rows // _ROW_ALIGN) * _ROW_ALIGN
    else:
        tile_rows = max(8, (tile_rows // 8) * 8)

    # v7x megacore: if the copy is non-trivial but would be a single grid
    # step, split rows so both TensorCores get work (no-op on v5e/v6e).
    if (tile_rows == rows and tile_cols == cols
            and rows >= 16 and rows * cols * itemsize > (1 << 20)):
        tile_rows = max(8, (rows // 2) // 8 * 8)

    return tile_rows, tile_cols


def reshape_forward(x, pixels, force_copy=True):
    """Pallas equivalent of `x.view(-1, pixels)`.

    force_copy=False: metadata-only jnp.reshape (zero HBM traffic) — the
    preferred production path.  force_copy=True: run the streaming identity
    copy kernel (what this exercise exercises).
    """
    total = x.size
    assert total % pixels == 0, "input size must be divisible by pixels"
    n_rows = total // pixels
    out_shape = (n_rows, pixels)

    if not force_copy:
        return jnp.reshape(x, out_shape)

    itemsize = jnp.dtype(x.dtype).itemsize
    rows, cols, pad = _lane_dense_layout(total, pixels)
    if pad:
        x_flat = jnp.pad(jnp.reshape(x, out_shape), ((0, 0), (0, pad)))
    else:
        x_flat = jnp.reshape(x, (rows, cols))

    tile_rows, tile_cols = _choose_tiles(rows, cols, itemsize)
    grid = (pl.cdiv(rows, tile_rows), pl.cdiv(cols, tile_cols))

    tile_bytes = tile_rows * tile_cols * itemsize
    vmem_limit = int(min(max(4 * tile_bytes + _VMEM_HEADROOM, _VMEM_FLOOR), _VMEM_CAP))

    out = pl.pallas_call(
        _copy_kernel,
        out_shape=jax.ShapeDtypeStruct((rows, cols), x.dtype),
        grid_spec=pltpu.PrefetchScalarGridSpec(
            num_scalar_prefetch=0,
            grid=grid,
            in_specs=[pl.BlockSpec((tile_rows, tile_cols), lambda i, j: (i, j))],
            out_specs=pl.BlockSpec((tile_rows, tile_cols), lambda i, j: (i, j)),
        ),
        compiler_params=pltpu.CompilerParams(
            dimension_semantics=("parallel", "parallel"),
            vmem_limit_bytes=vmem_limit,
        ),
        cost_estimate=pl.CostEstimate(
            flops=0,
            transcendentals=0,
            bytes_accessed=2 * rows * cols * itemsize,
        ),
    )(x_flat)

    if pad:
        out = out[:, :pixels]
    return jnp.reshape(out, out_shape)


if __name__ == "__main__":
    # Example input consistent with the module: NCHW image batch.
    B, C, H, W = 2, 4, 16, 16
    pixels = C * H * W  # 1024 — the `pixels` argument of reshape(pixels)

    key = jax.random.PRNGKey(0)
    x = jax.random.normal(key, (B, C, H, W), dtype=jnp.float32)

    y = reshape_forward(x, pixels)          # runs the Pallas copy kernel
    y = jax.block_until_ready(y)

    # Correctness check against the pure-JAX reference of x.view(-1, pixels).
    ref = jnp.reshape(x, (-1, pixels))
    assert y.shape == (B, pixels)
    assert y.dtype == x.dtype
    assert bool(jnp.array_equal(y, ref))

    # Also exercise the zero-copy fast path (metadata-only reshape).
    y_fast = jax.block_until_ready(reshape_forward(x, pixels, force_copy=False))
    assert bool(jnp.array_equal(y_fast, ref))

    print("KERNEL_OK")
</pallas_src>

<mosaic_0001>
module attributes {stable_mosaic.version = 11 : i64} {
  func.func @_copy_kernel(%arg0: i32, %arg1: i32, %arg2: memref<2x1024xf32, #tpu.memory_space<vmem>>, %arg3: memref<2x1024xf32, #tpu.memory_space<vmem>>) attributes {dimension_semantics = [#tpu.dimension_semantics<parallel>, #tpu.dimension_semantics<parallel>], iteration_bounds = array<i64: 1, 1>, scalar_prefetch = 0 : i64, scratch_operands = 0 : i64, tpu.core_type = #tpu.core_type<tc>, window_params = [{transform_indices = @transform_0, window_bounds = array<i64: 2, 1024>}, {transform_indices = @transform_1, window_bounds = array<i64: 2, 1024>}]} {
    %c0 = arith.constant 0 : index
    %c0_0 = arith.constant 0 : index
    %0 = vector.load %arg2[%c0, %c0_0] : memref<2x1024xf32, #tpu.memory_space<vmem>>, vector<2x1024xf32>
    %c0_1 = arith.constant 0 : index
    %c0_2 = arith.constant 0 : index
    %1 = vector.load %arg3[%c0_1, %c0_2] : memref<2x1024xf32, #tpu.memory_space<vmem>>, vector<2x1024xf32>
    tpu.vector_store %arg3[%c0_1, %c0_2], %0 {strides = array<i32>} : memref<2x1024xf32, #tpu.memory_space<vmem>>, vector<2x1024xf32>,
    return
  }
  func.func @transform_0(%arg0: i32, %arg1: i32) -> (i32, i32) {
    %c0_i32 = arith.constant 0 : i32
    return %arg0, %arg1 : i32, i32
  }
  func.func @transform_1(%arg0: i32, %arg1: i32) -> (i32, i32) {
    %c0_i32 = arith.constant 0 : i32
    return %arg0, %arg1 : i32, i32
  }
}

</mosaic_0001>

<llo_original>
// kernel: tpu_custom_call.1
$region0: #{tpu_custom_call.1}
  #allocation0 [shape = 'u32[]', space=smem, size = 0x4, offset = 0x4, fixed_abs, tag = 'smem constant byte address 0x4 - core index']
  #allocation1 [shape = 'u32[144,128]{1,0:T(1,128)}', space=vmem, size = 0x12000, scoped, tag = 'internal scratch']
  %s0 = inlined_call_operand.hbm [shape: f32[2,1024], index: 0, kind: input, shape index: {}]
  %s1 = inlined_call_operand.hbm [shape: f32[2,1024], index: 1, kind: output, shape index: {}]
  %s2 = sld [smem:[#allocation0]]
  $region18: #{tpu_custom_call.1} parent=0
    _
  %s4 = ssub.s32 1, %s2
  %s5 = scalar_select 0, %s4, %s2
  $region1: #{tpu_custom_call.1} parent=0
    #allocation2 [shape = 'u8[8192]{0}', space=vmem, size = 0x2000, scoped, tag = 'input window, operand 0, single buffered']
    #allocation3 [shape = 's32[1]{0}', space=sflag, size = 0x4, scoped, tag = 'scoped memory for tpu_custom_call.1']
    #allocation4 [shape = 's32[1]{0}', space=sflag, size = 0x4, scoped, tag = 'scoped memory for tpu_custom_call.1']
    #allocation5 [shape = 'u8[8192]{0}', space=vmem, size = 0x2000, scoped, tag = 'output window, operand 0, single buffered']
    %6 = vsyncpa [#allocation3], 0
    %7 = vsyncpa [#allocation4], 0
    // Predicated region
    $region2: #{tpu_custom_call.1} parent=1 // pred_check
      _
    $region3: #{tpu_custom_call.1} parent=1 // pred_check_branch
      %9 = sbr.rel (0) target = $region5
    $region4: #{tpu_custom_call.1} parent=1 // pred_region
      %s11 = ssub.s32 256, 256
      %12 = vsyncadd [#allocation3], %s11
      %s14 = sshll.u32 [#allocation2], 4
      %s15 = int_to_ptr.vmem [resolvable:$true] %s14
      %17 = dma.hbm_to_vmem [thread:$0]  %s0, 256, %s15, [#allocation3]
    $region5: #{tpu_custom_call.1} parent=1 // pred_fallthru
      _
    // Predicated region
    $region6: #{tpu_custom_call.1} parent=1 // pred_check
      _
    $region7: #{tpu_custom_call.1} parent=1 // pred_check_branch
      %19 = sbr.rel (0) target = $region9
    $region8: #{tpu_custom_call.1} parent=1 // pred_region
      %20 = dma.done [#allocation3], 256
    $region9: #{tpu_custom_call.1} parent=1 // pred_fallthru
      _
    %v21 = vld [vmem:[#allocation2] sm:$0xff]
    %v22 = vld [vmem:[#allocation2 + $0x8] sm:$0xff]
    %23 = vst [vmem:[#allocation5] sm:$0xff] %v21
    %24 = vst [vmem:[#allocation5 + $0x8] sm:$0xff] %v22
    // Predicated region
    $region10: #{tpu_custom_call.1} parent=1 // pred_check
      _
    $region11: #{tpu_custom_call.1} parent=1 // pred_check_branch
      %26 = sbr.rel (0) target = $region13
    $region12: #{tpu_custom_call.1} parent=1 // pred_region
      %s28 = ssub.s32 256, 256
      %29 = vsyncadd [#allocation4], %s28
      %s31 = sshll.u32 [#allocation5], 4
      %s32 = int_to_ptr.vmem [resolvable:$true] %s31
      %34 = dma.vmem_to_hbm [thread:$0]  %s32, 256, %s1, [#allocation4]
    $region13: #{tpu_custom_call.1} parent=1 // pred_fallthru
      _
    // Predicated region
    $region14: #{tpu_custom_call.1} parent=1 // pred_check
      _
    $region15: #{tpu_custom_call.1} parent=1 // pred_check_branch
      %36 = sbr.rel (0) target = $region17
    $region16: #{tpu_custom_call.1} parent=1 // pred_region
      %37 = dma.done [#allocation4], 256
    $region17: #{tpu_custom_call.1} parent=1 // pred_fallthru
      _
    %38 = vsyncpa [#allocation3], 1
    %39 = vsyncpa [#allocation4], 1

</llo_original>
